<compile_context>
chip_gen: v6e
topology: v6e:2x2x1
jax: 0.10.0
libtpu: 0.0.40
codegen_flags: <defaults>
</compile_context>

<pallas_src>
import math
import numpy as np
import jax
import jax.numpy as jnp
from jax import lax
from jax.experimental import pallas as pl
from jax.experimental.pallas import tpu as pltpu


# VMEM budgeting: keep the pipelined working set inside the smallest
# per-generation budget (v7x: 64 MiB per TensorCore).  The scoped limit we
# request is below that, but above the 16/32 MiB defaults on v5e/v6e.
_VMEM_LIMIT_BYTES = 48 * 1024 * 1024
_TILE_BUDGET_BYTES = 40 * 1024 * 1024


def _choose_row_tile(R, N):
    """Row-tile size: a multiple of 128 dividing N (or N itself), sized so the
    pass-2 double-buffered working set fits the VMEM budget, with T >= 2 when
    possible so v7x's two TensorCores both get work."""
    if N % 128 != 0 or N < 128:
        # TODO(synk): ragged N (not a multiple of 128) falls back to a single
        # full-array tile; extremely large ragged N could exceed the VMEM limit.
        return N
    cands = [t for t in range(128, N + 1, 128) if N % t == 0]

    def working_set(t):
        # 2 pipeline buffers of the (R, t, N) row slab + 2 of the (t, N) output.
        return 2 * (R * t * N + t * N) * 4

    fitting = [t for t in cands if working_set(t) <= _TILE_BUDGET_BYTES]
    tm = max(fitting) if fitting else 128
    if tm == N and (N // 2) in cands:
        tm = N // 2          # keep at least two row tiles (v7x megacore)
    return tm


# ----------------------------------------------------------------------------
# Kernel 1: streaming per-relation raw sums over one row tile.
#   rels_ref : (R, tm, N) VMEM block
#   out_ref  : (1, 1, R)  per-tile partial sums (last two dims = full extents)
# Reduce sublane (row) axis first -> only R lane-axis (XLU) reduces per tile.
# ----------------------------------------------------------------------------
def rowsum_kernel(rels_ref, out_ref):
    x = rels_ref[...]                       # (R, tm, N)
    s = jnp.sum(x, axis=1)                  # (R, N)  sublane reduce (cheap adds)
    out_ref[...] = jnp.sum(s, axis=-1).reshape(1, 1, -1)   # (1, 1, R)


# ----------------------------------------------------------------------------
# Kernel 2: unsymmetrized attention-weighted aggregation for one row tile.
#   U[rows, :] = sum_r scaled_w[r] * A_r[rows, :] + bias_sum
# Constants live in SMEM; the R reduction is an unrolled in-block loop.
# Only the contiguous row slab of rels is read (no strided column slab).
# ----------------------------------------------------------------------------
def aggregate_kernel(sw_sm, bsum_sm, row_ref, u_ref):
    R = row_ref.shape[0]

    def body(r, acc):
        return acc + sw_sm[r] * row_ref[r]          # (tm, N)

    acc = jnp.zeros(u_ref.shape, jnp.float32)
    acc = lax.fori_loop(0, R, body, acc, unroll=True)
    u_ref[...] = acc + bsum_sm[0]


# ----------------------------------------------------------------------------
# Kernel 3: symmetrization of U, one transpose per output tile.
#   out[rows, :] = 0.5 * (U[rows, :] + U[:, rows]^T)
# (bias_sum is already inside U and is symmetric, so it is preserved.)
# ----------------------------------------------------------------------------
def symmetrize_kernel(u_row_ref, u_col_ref, out_ref):
    out_ref[...] = 0.5 * (u_row_ref[...] + u_col_ref[...].T)


# ----------------------------------------------------------------------------
# Wrapper
# ----------------------------------------------------------------------------
@jax.jit
def dynamic_relation_aggregation(rels, params):
    R, N, _ = rels.shape
    tm = _choose_row_tile(R, N)
    T = N // tm

    cparams = pltpu.CompilerParams(
        dimension_semantics=("parallel",),
        vmem_limit_bytes=_VMEM_LIMIT_BYTES,
    )

    # ---- Pass 1: tiled streaming reduce (single HBM pass over rels) --------
    partial = pl.pallas_call(
        rowsum_kernel,
        out_shape=jax.ShapeDtypeStruct((T, 1, R), jnp.float32),
        grid=(T,),
        in_specs=[pl.BlockSpec((R, tm, N), lambda i: (0, i, 0))],
        out_specs=pl.BlockSpec((1, 1, R), lambda i: (i, 0, 0)),
        compiler_params=cparams,
    )(rels)
    sums = jnp.sum(partial[:, 0, :], axis=0)                 # (R,) raw sums of A_r

    # ---- Tiny attention MLP + softmax in plain JAX (negligible cost) -------
    # sum(w*x + b) == w*sum(x) + b*N*N  (algebraic fold, no per-element affine)
    feats = params["w_lin"] * sums + params["b_lin"] * float(N * N)
    h = jax.nn.relu(params["W1"] @ feats + params["b1"])
    logits = params["W2"] @ h + params["b2"]
    attn = jax.nn.softmax(logits)                            # (R,)

    # Constant folding for the aggregation pass.
    scaled_w = (attn * params["w_lin"]).astype(jnp.float32)              # (R,)
    bias_sum = jnp.sum(attn * params["b_lin"]).reshape(1).astype(jnp.float32)

    # ---- Pass 2: unsymmetrized aggregation, row slab only ------------------
    u = pl.pallas_call(
        aggregate_kernel,
        out_shape=jax.ShapeDtypeStruct((N, N), jnp.float32),
        grid=(T,),
        in_specs=[
            pl.BlockSpec(memory_space=pltpu.MemorySpace.SMEM),   # scaled_w (R,)
            pl.BlockSpec(memory_space=pltpu.MemorySpace.SMEM),   # bias_sum (1,)
            pl.BlockSpec((R, tm, N), lambda i: (0, i, 0)),       # contiguous row slab
        ],
        out_specs=pl.BlockSpec((tm, N), lambda i: (i, 0)),
        compiler_params=cparams,
    )(scaled_w, bias_sum, rels)

    # ---- Pass 3: symmetrize (one transpose per tile) ------------------------
    final_adj = pl.pallas_call(
        symmetrize_kernel,
        out_shape=jax.ShapeDtypeStruct((N, N), jnp.float32),
        grid=(T,),
        in_specs=[
            pl.BlockSpec((tm, N), lambda i: (i, 0)),             # U row tile
            pl.BlockSpec((N, tm), lambda i: (0, i)),             # U column tile
        ],
        out_specs=pl.BlockSpec((tm, N), lambda i: (i, 0)),
        compiler_params=cparams,
    )(u, u)

    return final_adj, attn


# ----------------------------------------------------------------------------
# Deterministic parameter initialization (shapes from the module __init__).
# ----------------------------------------------------------------------------
def init_params(key, R):
    ks = jax.random.split(key, 8)
    bound1 = 1.0 / math.sqrt(R)              # Linear(R, 64)
    bound2 = 1.0 / math.sqrt(64)              # Linear(64, R)
    xb = 1.414 * math.sqrt(6.0 / (R + 1))     # xavier_uniform(gain=1.414) for (R,1)
    params = dict(
        # NOTE: relation_importance is unused in the PyTorch forward; kept for parity.
        relation_importance=jax.random.uniform(ks[0], (R, 1), minval=-xb, maxval=xb),
        w_lin=jax.random.uniform(ks[1], (R,), minval=-1.0, maxval=1.0),  # R x Linear(1,1) w
        b_lin=jax.random.uniform(ks[2], (R,), minval=-1.0, maxval=1.0),  # R x Linear(1,1) b
        W1=jax.random.uniform(ks[3], (64, R), minval=-bound1, maxval=bound1),
        b1=jax.random.uniform(ks[4], (64,), minval=-bound1, maxval=bound1),
        W2=jax.random.uniform(ks[5], (R, 64), minval=-bound2, maxval=bound2),
        b2=jax.random.uniform(ks[6], (R,), minval=-bound2, maxval=bound2),
    )
    return jax.tree.map(lambda a: a.astype(jnp.float32), params)


# Pure-JAX reference (same math, dense-branch semantics of the module).
def reference_forward(rels, params):
    w = params["w_lin"][:, None, None]
    b = params["b_lin"][:, None, None]
    t = rels * w + b                                      # transformed relations
    feats = jnp.sum(t, axis=(1, 2))                       # relation_features (R,)
    h = jax.nn.relu(params["W1"] @ feats + params["b1"])
    logits = params["W2"] @ h + params["b2"]
    attn = jax.nn.softmax(logits)                         # attention_weights (R,)
    adj = jnp.einsum("r,rij->ij", attn, t)
    adj = 0.5 * (adj + adj.T)
    return adj, attn


if __name__ == "__main__":
    R, N = 4, 256   # num_relations = 4, graph with N nodes (densified adjacency)
    root = jax.random.PRNGKey(0)
    k_mask, k_val, k_par = jax.random.split(root, 3)

    # Sparse-ish synthetic relation adjacency matrices, stacked dense (R, N, N).
    # TODO(synk): the torch.sparse COO branch has no Pallas equivalent; relations
    # are densified and the dense-branch math of the module is implemented.
    mask = (jax.random.uniform(k_mask, (R, N, N)) < 0.05).astype(jnp.float32)
    vals = jax.random.uniform(k_val, (R, N, N), dtype=jnp.float32)
    rels = mask * vals

    params = init_params(k_par, R)

    final_adj, attn = dynamic_relation_aggregation(rels, params)
    jax.block_until_ready((final_adj, attn))

    ref_adj, ref_attn = reference_forward(rels, params)
    assert np.allclose(np.asarray(attn), np.asarray(ref_attn),
                       rtol=2e-2, atol=2e-2), "attention weights mismatch"
    assert np.allclose(np.asarray(final_adj), np.asarray(ref_adj),
                       rtol=2e-2, atol=2e-2), "aggregated adjacency mismatch"

    print("KERNEL_OK")
</pallas_src>

<mosaic_0001>
module attributes {stable_mosaic.version = 11 : i64} {
  func.func @rowsum_kernel(%arg0: i32, %arg1: memref<4x128x256xf32, #tpu.memory_space<vmem>>, %arg2: memref<1x1x4xf32, #tpu.memory_space<vmem>>) attributes {dimension_semantics = [#tpu.dimension_semantics<parallel>], iteration_bounds = array<i64: 2>, scalar_prefetch = 0 : i64, scratch_operands = 0 : i64, tpu.core_type = #tpu.core_type<tc>, window_params = [{transform_indices = @transform_0, window_bounds = array<i64: 4, 128, 256>}, {transform_indices = @transform_1, window_bounds = array<i64: 1, 1, 4>}]} {
    %c0 = arith.constant 0 : index
    %c0_0 = arith.constant 0 : index
    %c0_1 = arith.constant 0 : index
    %0 = vector.load %arg1[%c0, %c0_0, %c0_1] : memref<4x128x256xf32, #tpu.memory_space<vmem>>, vector<4x128x256xf32>
    %cst = arith.constant dense<0.000000e+00> : vector<4x256xf32>
    %1 = vector.multi_reduction <add>, %0, %cst [1] : vector<4x128x256xf32> to vector<4x256xf32>
    %cst_2 = arith.constant dense<0.000000e+00> : vector<4xf32>
    %2 = vector.multi_reduction <add>, %1, %cst_2 [1] : vector<4x256xf32> to vector<4xf32>
    %3 = vector.shape_cast %2 : vector<4xf32> to vector<1x1x4xf32>
    %c0_3 = arith.constant 0 : index
    %c0_4 = arith.constant 0 : index
    %c0_5 = arith.constant 0 : index
    %4 = vector.load %arg2[%c0_3, %c0_4, %c0_5] : memref<1x1x4xf32, #tpu.memory_space<vmem>>, vector<1x1x4xf32>
    tpu.vector_store %arg2[%c0_3, %c0_4, %c0_5], %3 {strides = array<i32>} : memref<1x1x4xf32, #tpu.memory_space<vmem>>, vector<1x1x4xf32>,
    return
  }
  func.func @transform_0(%arg0: i32) -> (i32, i32, i32) {
    %c0_i32 = arith.constant 0 : i32
    %c0_i32_0 = arith.constant 0 : i32
    %c0_i32_1 = arith.constant 0 : i32
    return %c0_i32, %arg0, %c0_i32_0 : i32, i32, i32
  }
  func.func @transform_1(%arg0: i32) -> (i32, i32, i32) {
    %c0_i32 = arith.constant 0 : i32
    %c0_i32_0 = arith.constant 0 : i32
    %c0_i32_1 = arith.constant 0 : i32
    return %arg0, %c0_i32, %c0_i32_0 : i32, i32, i32
  }
}

module attributes {stable_mosaic.version = 11 : i64} {
  func.func @symmetrize_kernel(%arg0: i32, %arg1: memref<128x256xf32, #tpu.memory_space<vmem>>, %arg2: memref<256x128xf32, #tpu.memory_space<vmem>>, %arg3: memref<128x256xf32, #tpu.memory_space<vmem>>) attributes {dimension_semantics = [#tpu.dimension_semantics<parallel>], iteration_bounds = array<i64: 2>, scalar_prefetch = 0 : i64, scratch_operands = 0 : i64, tpu.core_type = #tpu.core_type<tc>, window_params = [{transform_indices = @transform_0, window_bounds = array<i64: 128, 256>}, {transform_indices = @transform_1, window_bounds = array<i64: 256, 128>}, {transform_indices = @transform_2, window_bounds = array<i64: 128, 256>}]} {
    %c0 = arith.constant 0 : index
    %c0_0 = arith.constant 0 : index
    %0 = vector.load %arg1[%c0, %c0_0] : memref<128x256xf32, #tpu.memory_space<vmem>>, vector<128x256xf32>
    %c0_1 = arith.constant 0 : index
    %c0_2 = arith.constant 0 : index
    %1 = vector.load %arg2[%c0_1, %c0_2] : memref<256x128xf32, #tpu.memory_space<vmem>>, vector<256x128xf32>
    %2 = tpu.transpose %1, [1, 0] : vector<256x128xf32> -> vector<128x256xf32>
    %3 = arith.addf %0, %2 : vector<128x256xf32>
    %cst = arith.constant 5.000000e-01 : f32
    %4 = vector.broadcast %cst : f32 to vector<128x256xf32>
    %5 = arith.mulf %4, %3 : vector<128x256xf32>
    %c0_3 = arith.constant 0 : index
    %c0_4 = arith.constant 0 : index
    %6 = vector.load %arg3[%c0_3, %c0_4] : memref<128x256xf32, #tpu.memory_space<vmem>>, vector<128x256xf32>
    tpu.vector_store %arg3[%c0_3, %c0_4], %5 {strides = array<i32>} : memref<128x256xf32, #tpu.memory_space<vmem>>, vector<128x256xf32>,
    return
  }
  func.func @transform_0(%arg0: i32) -> (i32, i32) {
    %c0_i32 = arith.constant 0 : i32
    %c0_i32_0 = arith.constant 0 : i32
    return %arg0, %c0_i32 : i32, i32
  }
  func.func @transform_1(%arg0: i32) -> (i32, i32) {
    %c0_i32 = arith.constant 0 : i32
    %c0_i32_0 = arith.constant 0 : i32
    return %c0_i32, %arg0 : i32, i32
  }
  func.func @transform_2(%arg0: i32) -> (i32, i32) {
    %c0_i32 = arith.constant 0 : i32
    %c0_i32_0 = arith.constant 0 : i32
    return %arg0, %c0_i32 : i32, i32
  }
}

module attributes {stable_mosaic.version = 11 : i64} {
  func.func @aggregate_kernel(%arg0: i32, %arg1: memref<4xf32, #tpu.memory_space<smem>>, %arg2: memref<1xf32, #tpu.memory_space<smem>>, %arg3: memref<4x128x256xf32, #tpu.memory_space<vmem>>, %arg4: memref<128x256xf32, #tpu.memory_space<vmem>>) attributes {dimension_semantics = [#tpu.dimension_semantics<parallel>], iteration_bounds = array<i64: 2>, scalar_prefetch = 0 : i64, scratch_operands = 0 : i64, tpu.core_type = #tpu.core_type<tc>, window_params = [{transform_indices = @transform_0, window_bounds = array<i64: 4>}, {transform_indices = @transform_1, window_bounds = array<i64: 1>}, {transform_indices = @transform_2, window_bounds = array<i64: 4, 128, 256>}, {transform_indices = @transform_3, window_bounds = array<i64: 128, 256>}]} {
    %cst = arith.constant 0.000000e+00 : f32
    %0 = vector.broadcast %cst : f32 to vector<128x256xf32>
    %c0_i32 = arith.constant 0 : i32
    %1 = arith.index_cast %c0_i32 : i32 to index
    %2 = memref.load %arg1[%1] : memref<4xf32, #tpu.memory_space<smem>>
    %3 = arith.index_cast %c0_i32 : i32 to index
    %c0 = arith.constant 0 : index
    %c0_0 = arith.constant 0 : index
    %4 = vector.load %arg3[%3, %c0, %c0_0] : memref<4x128x256xf32, #tpu.memory_space<vmem>>, vector<1x128x256xf32>
    %5 = vector.shape_cast %4 : vector<1x128x256xf32> to vector<128x256xf32>
    %6 = vector.broadcast %2 : f32 to vector<128x256xf32>
    %7 = arith.mulf %6, %5 : vector<128x256xf32>
    %8 = arith.addf %0, %7 : vector<128x256xf32>
    %c1_i32 = arith.constant 1 : i32
    %9 = arith.index_cast %c1_i32 : i32 to index
    %10 = memref.load %arg1[%9] : memref<4xf32, #tpu.memory_space<smem>>
    %11 = arith.index_cast %c1_i32 : i32 to index
    %c0_1 = arith.constant 0 : index
    %c0_2 = arith.constant 0 : index
    %12 = vector.load %arg3[%11, %c0_1, %c0_2] : memref<4x128x256xf32, #tpu.memory_space<vmem>>, vector<1x128x256xf32>
    %13 = vector.shape_cast %12 : vector<1x128x256xf32> to vector<128x256xf32>
    %14 = vector.broadcast %10 : f32 to vector<128x256xf32>
    %15 = arith.mulf %14, %13 : vector<128x256xf32>
    %16 = arith.addf %8, %15 : vector<128x256xf32>
    %c2_i32 = arith.constant 2 : i32
    %17 = arith.index_cast %c2_i32 : i32 to index
    %18 = memref.load %arg1[%17] : memref<4xf32, #tpu.memory_space<smem>>
    %19 = arith.index_cast %c2_i32 : i32 to index
    %c0_3 = arith.constant 0 : index
    %c0_4 = arith.constant 0 : index
    %20 = vector.load %arg3[%19, %c0_3, %c0_4] : memref<4x128x256xf32, #tpu.memory_space<vmem>>, vector<1x128x256xf32>
    %21 = vector.shape_cast %20 : vector<1x128x256xf32> to vector<128x256xf32>
    %22 = vector.broadcast %18 : f32 to vector<128x256xf32>
    %23 = arith.mulf %22, %21 : vector<128x256xf32>
    %24 = arith.addf %16, %23 : vector<128x256xf32>
    %c3_i32 = arith.constant 3 : i32
    %25 = arith.index_cast %c3_i32 : i32 to index
    %26 = memref.load %arg1[%25] : memref<4xf32, #tpu.memory_space<smem>>
    %27 = arith.index_cast %c3_i32 : i32 to index
    %c0_5 = arith.constant 0 : index
    %c0_6 = arith.constant 0 : index
    %28 = vector.load %arg3[%27, %c0_5, %c0_6] : memref<4x128x256xf32, #tpu.memory_space<vmem>>, vector<1x128x256xf32>
    %29 = vector.shape_cast %28 : vector<1x128x256xf32> to vector<128x256xf32>
    %30 = vector.broadcast %26 : f32 to vector<128x256xf32>
    %31 = arith.mulf %30, %29 : vector<128x256xf32>
    %32 = arith.addf %24, %31 : vector<128x256xf32>
    %c4_i32 = arith.constant 4 : i32
    %c0_7 = arith.constant 0 : index
    %33 = memref.load %arg2[%c0_7] : memref<1xf32, #tpu.memory_space<smem>>
    %34 = vector.broadcast %33 : f32 to vector<128x256xf32>
    %35 = arith.addf %32, %34 : vector<128x256xf32>
    %c0_8 = arith.constant 0 : index
    %c0_9 = arith.constant 0 : index
    %36 = vector.load %arg4[%c0_8, %c0_9] : memref<128x256xf32, #tpu.memory_space<vmem>>, vector<128x256xf32>
    tpu.vector_store %arg4[%c0_8, %c0_9], %35 {strides = array<i32>} : memref<128x256xf32, #tpu.memory_space<vmem>>, vector<128x256xf32>,
    return
  }
  func.func @transform_0(%arg0: i32) -> i32 {
    %c0_i32 = arith.constant 0 : i32
    %c0_i32_0 = arith.constant 0 : i32
    return %c0_i32 : i32
  }
  func.func @transform_1(%arg0: i32) -> i32 {
    %c0_i32 = arith.constant 0 : i32
    %c0_i32_0 = arith.constant 0 : i32
    return %c0_i32 : i32
  }
  func.func @transform_2(%arg0: i32) -> (i32, i32, i32) {
    %c0_i32 = arith.constant 0 : i32
    %c0_i32_0 = arith.constant 0 : i32
    %c0_i32_1 = arith.constant 0 : i32
    return %c0_i32, %arg0, %c0_i32_0 : i32, i32, i32
  }
  func.func @transform_3(%arg0: i32) -> (i32, i32) {
    %c0_i32 = arith.constant 0 : i32
    %c0_i32_0 = arith.constant 0 : i32
    return %arg0, %c0_i32 : i32, i32
  }
}

</mosaic_0001>

<llo_original>
// kernel: mul.6
$region0: #{mul.6}
  #allocation0 [shape = 's32[1]{0}', space=sflag, size = 0x4, scoped, tag = 'scoped memory for mul.6']
  %s0 = inlined_call_operand.vmem [shape: f32[4], index: 0, kind: input, shape index: {}]
  %s1 = inlined_call_operand.vmem [shape: f32[4], index: 1, kind: input, shape index: {}]
  %s2 = inlined_call_operand.vmem [shape: f32[4], index: 2, kind: output, shape index: {}]
  %v3 = vld [vmem:[%s0] sm:$0x1]
  %v4 = vld [vmem:[%s1] sm:$0x1]
  %5 = xla_tuple %v3, %v4
  %6 = xla_tuple %5
  %v7 = vmul.f32 %v3, %v4
  %8 = xla_tuple %v7
  %9 = vst [vmem:[%s2] sm:$0x1] %v7

</llo_original>
